<compile_context>
chip_gen: v6e
topology: v6e:2x2x1
jax: 0.10.0
libtpu: 0.0.40
codegen_flags: <defaults>
</compile_context>

<pallas_src>
import functools

import jax
import jax.numpy as jnp
from jax import lax
from jax.experimental import pallas as pl
from jax.experimental.pallas import tpu as pltpu


def _swish(x):
    return x * jax.nn.sigmoid(x)


def _softplus(x):
    # numerically stable softplus
    return jnp.maximum(x, 0.0) + jnp.log1p(jnp.exp(-jnp.abs(x)))


def _round_up(n, m):
    return -(-n // m) * m


def _batch_tile(b):
    if b <= 512:
        return b
    for tb in (512, 256, 128, 64, 32, 16, 8):
        if b % tb == 0:
            return tb
    return b


# ----------------------------------------------------------------------------
# Kernel
# ----------------------------------------------------------------------------
def _pt_model_kernel(x_ref, vec_ref, w_ref, out_ref, *,
                     ed, ehid, eh, out_w, ret_logvar):
    """One batch tile of the whole ensemble; one MXU matmul per layer.

    vec_ref rows: 0 mu, 1 inv_sigma, 2 b0, 3 b1, 4 b2, 5 b3(packed),
                  6 max_logvar(packed, zero over mean cols),
                  7 min_logvar(packed, zero over mean cols)
    w_ref rows:   [0, ed) w0_bd | [ed, ed+ehid) w1_bd |
                  [ed+ehid, ed+2*ehid) w2_bd | [ed+2*ehid, ed+3*ehid) w3_bd
    """
    x = x_ref[...]                                           # (TB, ed)
    mu = vec_ref[0:1, :ed]
    inv_sigma = vec_ref[1:2, :ed]
    x = (x - mu) * inv_sigma                                 # mul, not divide

    w0 = w_ref[0:ed, :ehid]
    w1 = w_ref[ed:ed + ehid, :ehid]
    w2 = w_ref[ed + ehid:ed + 2 * ehid, :ehid]
    w3 = w_ref[ed + 2 * ehid:ed + 3 * ehid, :out_w]

    b0 = vec_ref[2:3, :ehid]
    b1 = vec_ref[3:4, :ehid]
    b2 = vec_ref[4:5, :ehid]
    b3 = vec_ref[5:6, :out_w]
    max_lv = vec_ref[6:7, :out_w]
    min_lv = vec_ref[7:8, :out_w]

    h = _swish(jnp.dot(x, w0, preferred_element_type=jnp.float32) + b0)
    h = _swish(jnp.dot(h, w1, preferred_element_type=jnp.float32) + b1)
    h = _swish(jnp.dot(h, w2, preferred_element_type=jnp.float32) + b2)

    # (TB, out_w): cols [0, eh) = means, [eh, 2*eh) = logvars, rest = padding.
    out = jnp.dot(h, w3, preferred_element_type=jnp.float32) + b3

    # Soft-bound the logvar columns.  max/min rows are zero over the mean /
    # padding columns, so the full-width computation is numerically safe and
    # those lanes are discarded by the select below — no lane slicing needed.
    bounded = max_lv - _softplus(max_lv - out)
    bounded = min_lv + _softplus(bounded - min_lv)
    second = bounded if ret_logvar else jnp.exp(bounded)

    col = lax.broadcasted_iota(jnp.int32, out.shape, 1)
    out_ref[...] = jnp.where(col >= eh, second, out)         # single dense store


# ----------------------------------------------------------------------------
# One-time parameter packing (hoisted out of the per-call forward)
# ----------------------------------------------------------------------------
def _block_diag(w):
    """(E, n_in, n_out) -> (E*n_in, E*n_out) block-diagonal weight."""
    E, n_in, n_out = w.shape
    eye = jnp.eye(E, dtype=w.dtype)
    return jnp.einsum('eio,ef->eifo', w, eye).reshape(E * n_in, E * n_out)


def pack_params(params):
    """Build the two packed operand slabs.  Call ONCE per parameter set."""
    (mu, sigma, max_lv, min_lv, w0, b0, w1, b1, w2, b2, w3, b3) = params
    E, Din, H = w0.shape
    Dout = w3.shape[-1]
    half = Dout // 2
    ED, EH, eh = E * Din, E * H, E * half
    OUT_W = max(128, _round_up(2 * eh, 128))      # lane-dense output width
    WW = max(EH, OUT_W)                           # weight slab width
    SW = max(ED, EH, OUT_W)                       # vector slab width

    def pad_row(a, width, value=0.0):
        n = a.shape[-1]
        if n == width:
            return a
        return jnp.concatenate(
            [a, jnp.full((a.shape[0], width - n), value, a.dtype)], axis=-1)

    # Safe reciprocal of sigma (PtModel.__init__ sets sigma to zeros).
    sigma_safe = jnp.where(sigma < 1e-12, 1.0, sigma)
    inv_sigma = 1.0 / sigma_safe

    mu_row = pad_row(jnp.tile(mu, (1, E)), SW)
    isg_row = pad_row(jnp.tile(inv_sigma, (1, E)), SW, value=1.0)
    b0_row = pad_row(b0.reshape(1, EH), SW)
    b1_row = pad_row(b1.reshape(1, EH), SW)
    b2_row = pad_row(b2.reshape(1, EH), SW)
    b3_row = pad_row(jnp.concatenate([b3[..., :half].reshape(1, eh),
                                      b3[..., half:].reshape(1, eh)], axis=1), SW)
    zeros_eh = jnp.zeros((1, eh), jnp.float32)
    max_row = pad_row(jnp.concatenate([zeros_eh, jnp.tile(max_lv, (1, E))], axis=1), SW)
    min_row = pad_row(jnp.concatenate([zeros_eh, jnp.tile(min_lv, (1, E))], axis=1), SW)

    vec_slab = jnp.concatenate(
        [mu_row, isg_row, b0_row, b1_row, b2_row, b3_row, max_row, min_row],
        axis=0).astype(jnp.float32)                                   # (8, SW)

    def pad_cols(w, width):
        n = w.shape[-1]
        if n == width:
            return w
        return jnp.concatenate([w, jnp.zeros((w.shape[0], width - n), w.dtype)],
                               axis=-1)

    w0_bd = pad_cols(_block_diag(w0), WW)                             # (ED, WW)
    w1_bd = pad_cols(_block_diag(w1), WW)                             # (EH, WW)
    w2_bd = pad_cols(_block_diag(w2), WW)                             # (EH, WW)
    # lin3 columns reordered -> [all means | all logvars] (ensemble-major).
    w3_bd = pad_cols(jnp.concatenate([_block_diag(w3[..., :half]),
                                      _block_diag(w3[..., half:])], axis=1), WW)
    w_slab = jnp.concatenate([w0_bd, w1_bd, w2_bd, w3_bd],
                             axis=0).astype(jnp.float32)              # (ED+3*EH, WW)

    meta = (E, Din, H, half)                      # static ints for the forward
    return (vec_slab, w_slab), meta


# ----------------------------------------------------------------------------
# Forward
# ----------------------------------------------------------------------------
@functools.partial(jax.jit, static_argnames=("meta", "ret_logvar"))
def pt_model_forward(inputs, vec_slab, w_slab, meta, ret_logvar=False):
    E, Din, H, half = meta
    B = inputs.shape[1]
    ED, EH, eh = E * Din, E * H, E * half
    OUT_W = max(128, _round_up(2 * eh, 128))
    SW = vec_slab.shape[1]
    WW = w_slab.shape[1]
    WR = w_slab.shape[0]

    # Only per-call activation packing remains in the hot path.
    x_p = jnp.transpose(inputs, (1, 0, 2)).reshape(B, ED)             # (B, E*Din)

    TB = _batch_tile(B)
    grid = (B // TB,) if B % TB == 0 else (1,)
    if B % TB != 0:
        TB = B

    kernel = functools.partial(_pt_model_kernel, ed=ED, ehid=EH, eh=eh,
                               out_w=OUT_W, ret_logvar=ret_logvar)

    packed = pl.pallas_call(
        kernel,
        out_shape=jax.ShapeDtypeStruct((B, OUT_W), jnp.float32),
        grid=grid,
        in_specs=[
            pl.BlockSpec((TB, ED), lambda i: (i, 0)),       # x tile streams
            pl.BlockSpec((8, SW), lambda i: (0, 0)),        # vec slab resident
            pl.BlockSpec((WR, WW), lambda i: (0, 0)),       # weights resident
        ],
        out_specs=pl.BlockSpec((TB, OUT_W), lambda i: (i, 0)),
        compiler_params=pltpu.CompilerParams(
            dimension_semantics=("parallel",)),             # v7x: 2 TCs split batch
    )(x_p, vec_slab, w_slab)

    # Single slice -> reshape -> transpose unpack.
    out = packed[:, :2 * eh].reshape(B, 2, E, half)
    out = jnp.transpose(out, (1, 2, 0, 3))                  # (2, E, B, half)
    return out[0], out[1]


# ----------------------------------------------------------------------------
# Reference + synthetic params + demo
# ----------------------------------------------------------------------------
def init_params(key, ensemble, dim_in, dim_out, hidden):
    """Deterministic synthetic parameters matching PtModel.__init__ shapes."""
    keys = jax.random.split(key, 4)

    def affine(k, n_in, n_out):
        std = 1.0 / (2.0 * jnp.sqrt(jnp.float32(n_in)))
        w = (jax.random.truncated_normal(
            k, -2.0, 2.0, (ensemble, n_in, n_out), jnp.float32) * std)
        b = jnp.zeros((ensemble, 1, n_out), jnp.float32)
        return w, b

    w0, b0 = affine(keys[0], dim_in, hidden)
    w1, b1 = affine(keys[1], hidden, hidden)
    w2, b2 = affine(keys[2], hidden, hidden)
    w3, b3 = affine(keys[3], hidden, dim_out)

    mu = jnp.zeros((1, dim_in), jnp.float32)
    # __init__ sets sigma to zeros; use ones (as after fit_input_stats on
    # standardized data) to avoid division by zero in the demo/reference.
    sigma = jnp.ones((1, dim_in), jnp.float32)
    max_lv = jnp.ones((1, dim_out // 2), jnp.float32) / 2.0
    min_lv = -jnp.ones((1, dim_out // 2), jnp.float32) * 10.0
    return (mu, sigma, max_lv, min_lv, w0, b0, w1, b1, w2, b2, w3, b3)


def pt_model_forward_ref(inputs, params, ret_logvar=False):
    """Pure-JAX reference mirroring the PyTorch forward."""
    (mu, sigma, max_lv, min_lv,
     w0, b0, w1, b1, w2, b2, w3, b3) = params
    half = w3.shape[-1] // 2
    x = (inputs - mu) / sigma
    swish = lambda v: v * jax.nn.sigmoid(v)
    x = swish(jnp.einsum('ebi,eih->ebh', x, w0) + b0)
    x = swish(jnp.einsum('ebi,eih->ebh', x, w1) + b1)
    x = swish(jnp.einsum('ebi,eih->ebh', x, w2) + b2)
    x = jnp.einsum('ebi,eih->ebh', x, w3) + b3
    mean = x[..., :half]
    logvar = x[..., half:]
    logvar = max_lv - jax.nn.softplus(max_lv - logvar)
    logvar = min_lv + jax.nn.softplus(logvar - min_lv)
    if ret_logvar:
        return mean, logvar
    return mean, jnp.exp(logvar)


if __name__ == "__main__":
    ENSEMBLE, BATCH, DIM_IN, DIM_OUT, HIDDEN = 4, 8, 16, 8, 32

    key = jax.random.PRNGKey(0)
    pkey, xkey = jax.random.split(key)
    params = init_params(pkey, ENSEMBLE, DIM_IN, DIM_OUT, HIDDEN)
    inputs = jax.random.normal(xkey, (ENSEMBLE, BATCH, DIM_IN), jnp.float32)

    # One-time packing (hoisted out of the hot path per perf review).
    (vec_slab, w_slab), meta = pack_params(params)
    jax.block_until_ready((vec_slab, w_slab))

    mean, var = pt_model_forward(inputs, vec_slab, w_slab, meta, ret_logvar=False)
    jax.block_until_ready((mean, var))

    mean_ref, var_ref = pt_model_forward_ref(inputs, params, ret_logvar=False)
    assert jnp.allclose(mean, mean_ref, rtol=1e-5, atol=1e-5)
    assert jnp.allclose(var, var_ref, rtol=1e-5, atol=1e-5)

    # also check the ret_logvar path
    mean2, lv = pt_model_forward(inputs, vec_slab, w_slab, meta, ret_logvar=True)
    mean2_ref, lv_ref = pt_model_forward_ref(inputs, params, ret_logvar=True)
    jax.block_until_ready((mean2, lv))
    assert jnp.allclose(mean2, mean2_ref, rtol=1e-5, atol=1e-5)
    assert jnp.allclose(lv, lv_ref, rtol=1e-5, atol=1e-5)

    # TODO(synk): compute_decays / fit_input_stats are training-time helpers,
    # intentionally not kernelized.
    print("KERNEL_OK")
</pallas_src>

<mosaic_0001>
module attributes {stable_mosaic.version = 11 : i64} {
  func.func @_pt_model_kernel(%arg0: i32, %arg1: memref<8x64xf32, #tpu.memory_space<vmem>>, %arg2: memref<8x128xf32, #tpu.memory_space<vmem>>, %arg3: memref<448x128xf32, #tpu.memory_space<vmem>>, %arg4: memref<8x128xf32, #tpu.memory_space<vmem>>) attributes {dimension_semantics = [#tpu.dimension_semantics<parallel>], iteration_bounds = array<i64: 1>, scalar_prefetch = 0 : i64, scratch_operands = 0 : i64, tpu.core_type = #tpu.core_type<tc>, window_params = [{transform_indices = @transform_0, window_bounds = array<i64: 8, 64>}, {pipeline_mode = #tpu.pipeline_mode<synchronous>, transform_indices = @transform_1, window_bounds = array<i64: 8, 128>}, {pipeline_mode = #tpu.pipeline_mode<synchronous>, transform_indices = @transform_2, window_bounds = array<i64: 448, 128>}, {transform_indices = @transform_3, window_bounds = array<i64: 8, 128>}]} {
    %c0 = arith.constant 0 : index
    %c0_0 = arith.constant 0 : index
    %0 = vector.load %arg1[%c0, %c0_0] : memref<8x64xf32, #tpu.memory_space<vmem>>, vector<8x64xf32>
    %c0_1 = arith.constant 0 : index
    %c0_2 = arith.constant 0 : index
    %1 = vector.load %arg2[%c0_1, %c0_2] : memref<8x128xf32, #tpu.memory_space<vmem>>, vector<1x64xf32>
    %c1 = arith.constant 1 : index
    %c0_3 = arith.constant 0 : index
    %2 = vector.load %arg2[%c1, %c0_3] : memref<8x128xf32, #tpu.memory_space<vmem>>, vector<1x64xf32>
    %3 = vector.broadcast %1 : vector<1x64xf32> to vector<8x64xf32>
    %4 = arith.subf %0, %3 : vector<8x64xf32>
    %5 = vector.broadcast %2 : vector<1x64xf32> to vector<8x64xf32>
    %6 = arith.mulf %4, %5 : vector<8x64xf32>
    %c0_4 = arith.constant 0 : index
    %c0_5 = arith.constant 0 : index
    %7 = vector.load %arg3[%c0_4, %c0_5] : memref<448x128xf32, #tpu.memory_space<vmem>>, vector<64x128xf32>
    %c64 = arith.constant 64 : index
    %c0_6 = arith.constant 0 : index
    %8 = vector.load %arg3[%c64, %c0_6] : memref<448x128xf32, #tpu.memory_space<vmem>>, vector<128x128xf32>
    %c192 = arith.constant 192 : index
    %c0_7 = arith.constant 0 : index
    %9 = vector.load %arg3[%c192, %c0_7] : memref<448x128xf32, #tpu.memory_space<vmem>>, vector<128x128xf32>
    %c320 = arith.constant 320 : index
    %c0_8 = arith.constant 0 : index
    %10 = vector.load %arg3[%c320, %c0_8] : memref<448x128xf32, #tpu.memory_space<vmem>>, vector<128x128xf32>
    %c2 = arith.constant 2 : index
    %c0_9 = arith.constant 0 : index
    %11 = vector.load %arg2[%c2, %c0_9] : memref<8x128xf32, #tpu.memory_space<vmem>>, vector<1x128xf32>
    %c3 = arith.constant 3 : index
    %c0_10 = arith.constant 0 : index
    %12 = vector.load %arg2[%c3, %c0_10] : memref<8x128xf32, #tpu.memory_space<vmem>>, vector<1x128xf32>
    %c4 = arith.constant 4 : index
    %c0_11 = arith.constant 0 : index
    %13 = vector.load %arg2[%c4, %c0_11] : memref<8x128xf32, #tpu.memory_space<vmem>>, vector<1x128xf32>
    %c5 = arith.constant 5 : index
    %c0_12 = arith.constant 0 : index
    %14 = vector.load %arg2[%c5, %c0_12] : memref<8x128xf32, #tpu.memory_space<vmem>>, vector<1x128xf32>
    %c6 = arith.constant 6 : index
    %c0_13 = arith.constant 0 : index
    %15 = vector.load %arg2[%c6, %c0_13] : memref<8x128xf32, #tpu.memory_space<vmem>>, vector<1x128xf32>
    %c7 = arith.constant 7 : index
    %c0_14 = arith.constant 0 : index
    %16 = vector.load %arg2[%c7, %c0_14] : memref<8x128xf32, #tpu.memory_space<vmem>>, vector<1x128xf32>
    %cst = arith.constant dense<0.000000e+00> : vector<8x128xf32>
    %17 = tpu.matmul %6, %7, %cst {dimension_numbers = #tpu.dot_dimension_numbers<[1], [0], [0], [1], [0, 0, 1, 1], [], []>} : vector<8x64xf32>, vector<64x128xf32>, vector<8x128xf32> -> vector<8x128xf32>
    %18 = vector.broadcast %11 : vector<1x128xf32> to vector<8x128xf32>
    %19 = arith.addf %17, %18 : vector<8x128xf32>
    %20 = arith.negf %19 : vector<8x128xf32>
    %21 = math.exp %20 : vector<8x128xf32>
    %cst_15 = arith.constant 1.000000e+00 : f32
    %22 = vector.broadcast %cst_15 : f32 to vector<8x128xf32>
    %23 = arith.addf %22, %21 : vector<8x128xf32>
    %24 = arith.divf %22, %23 : vector<8x128xf32>
    %25 = arith.mulf %19, %24 : vector<8x128xf32>
    %cst_16 = arith.constant dense<0.000000e+00> : vector<8x128xf32>
    %26 = tpu.matmul %25, %8, %cst_16 {dimension_numbers = #tpu.dot_dimension_numbers<[1], [0], [0], [1], [0, 0, 1, 1], [], []>} : vector<8x128xf32>, vector<128x128xf32>, vector<8x128xf32> -> vector<8x128xf32>
    %27 = vector.broadcast %12 : vector<1x128xf32> to vector<8x128xf32>
    %28 = arith.addf %26, %27 : vector<8x128xf32>
    %29 = arith.negf %28 : vector<8x128xf32>
    %30 = math.exp %29 : vector<8x128xf32>
    %cst_17 = arith.constant 1.000000e+00 : f32
    %31 = vector.broadcast %cst_17 : f32 to vector<8x128xf32>
    %32 = arith.addf %31, %30 : vector<8x128xf32>
    %33 = arith.divf %31, %32 : vector<8x128xf32>
    %34 = arith.mulf %28, %33 : vector<8x128xf32>
    %cst_18 = arith.constant dense<0.000000e+00> : vector<8x128xf32>
    %35 = tpu.matmul %34, %9, %cst_18 {dimension_numbers = #tpu.dot_dimension_numbers<[1], [0], [0], [1], [0, 0, 1, 1], [], []>} : vector<8x128xf32>, vector<128x128xf32>, vector<8x128xf32> -> vector<8x128xf32>
    %36 = vector.broadcast %13 : vector<1x128xf32> to vector<8x128xf32>
    %37 = arith.addf %35, %36 : vector<8x128xf32>
    %38 = arith.negf %37 : vector<8x128xf32>
    %39 = math.exp %38 : vector<8x128xf32>
    %cst_19 = arith.constant 1.000000e+00 : f32
    %40 = vector.broadcast %cst_19 : f32 to vector<8x128xf32>
    %41 = arith.addf %40, %39 : vector<8x128xf32>
    %42 = arith.divf %40, %41 : vector<8x128xf32>
    %43 = arith.mulf %37, %42 : vector<8x128xf32>
    %cst_20 = arith.constant dense<0.000000e+00> : vector<8x128xf32>
    %44 = tpu.matmul %43, %10, %cst_20 {dimension_numbers = #tpu.dot_dimension_numbers<[1], [0], [0], [1], [0, 0, 1, 1], [], []>} : vector<8x128xf32>, vector<128x128xf32>, vector<8x128xf32> -> vector<8x128xf32>
    %45 = vector.broadcast %14 : vector<1x128xf32> to vector<8x128xf32>
    %46 = arith.addf %44, %45 : vector<8x128xf32>
    %47 = vector.broadcast %15 : vector<1x128xf32> to vector<8x128xf32>
    %48 = arith.subf %47, %46 : vector<8x128xf32>
    %cst_21 = arith.constant 0.000000e+00 : f32
    %49 = vector.broadcast %cst_21 : f32 to vector<8x128xf32>
    %50 = arith.maximumf %48, %49 : vector<8x128xf32>
    %51 = math.absf %48 : vector<8x128xf32>
    %cst_22 = arith.constant 0.000000e+00 : f32
    %52 = vector.broadcast %cst_22 : f32 to vector<8x128xf32>
    %53 = arith.subf %52, %51 : vector<8x128xf32>
    %54 = math.exp %53 : vector<8x128xf32>
    %55 = math.log1p %54 : vector<8x128xf32>
    %56 = arith.addf %50, %55 : vector<8x128xf32>
    %57 = vector.broadcast %15 : vector<1x128xf32> to vector<8x128xf32>
    %58 = arith.subf %57, %56 : vector<8x128xf32>
    %59 = vector.broadcast %16 : vector<1x128xf32> to vector<8x128xf32>
    %60 = arith.subf %58, %59 : vector<8x128xf32>
    %cst_23 = arith.constant 0.000000e+00 : f32
    %61 = vector.broadcast %cst_23 : f32 to vector<8x128xf32>
    %62 = arith.maximumf %60, %61 : vector<8x128xf32>
    %63 = math.absf %60 : vector<8x128xf32>
    %cst_24 = arith.constant 0.000000e+00 : f32
    %64 = vector.broadcast %cst_24 : f32 to vector<8x128xf32>
    %65 = arith.subf %64, %63 : vector<8x128xf32>
    %66 = math.exp %65 : vector<8x128xf32>
    %67 = math.log1p %66 : vector<8x128xf32>
    %68 = arith.addf %62, %67 : vector<8x128xf32>
    %69 = vector.broadcast %16 : vector<1x128xf32> to vector<8x128xf32>
    %70 = arith.addf %69, %68 : vector<8x128xf32>
    %71 = math.exp %70 : vector<8x128xf32>
    %72 = tpu.iota {dimensions = array<i32: 1>} : vector<8x128xi32>
    %c16_i32 = arith.constant 16 : i32
    %73 = vector.broadcast %c16_i32 : i32 to vector<8x128xi32>
    %74 = arith.cmpi sge, %72, %73 : vector<8x128xi32>
    %75 = arith.select %74, %71, %46 : vector<8x128xi1>, vector<8x128xf32>
    %c0_25 = arith.constant 0 : index
    %c0_26 = arith.constant 0 : index
    %76 = vector.load %arg4[%c0_25, %c0_26] : memref<8x128xf32, #tpu.memory_space<vmem>>, vector<8x128xf32>
    tpu.vector_store %arg4[%c0_25, %c0_26], %75 {strides = array<i32>} : memref<8x128xf32, #tpu.memory_space<vmem>>, vector<8x128xf32>,
    return
  }
  func.func @transform_0(%arg0: i32) -> (i32, i32) {
    %c0_i32 = arith.constant 0 : i32
    %c0_i32_0 = arith.constant 0 : i32
    return %arg0, %c0_i32 : i32, i32
  }
  func.func @transform_1(%arg0: i32) -> (i32, i32) {
    %c0_i32 = arith.constant 0 : i32
    %c0_i32_0 = arith.constant 0 : i32
    %c0_i32_1 = arith.constant 0 : i32
    return %c0_i32, %c0_i32_0 : i32, i32
  }
  func.func @transform_2(%arg0: i32) -> (i32, i32) {
    %c0_i32 = arith.constant 0 : i32
    %c0_i32_0 = arith.constant 0 : i32
    %c0_i32_1 = arith.constant 0 : i32
    return %c0_i32, %c0_i32_0 : i32, i32
  }
  func.func @transform_3(%arg0: i32) -> (i32, i32) {
    %c0_i32 = arith.constant 0 : i32
    %c0_i32_0 = arith.constant 0 : i32
    return %arg0, %c0_i32 : i32, i32
  }
}

</mosaic_0001>

<llo_original>
// kernel: pt_model_forward.1
$region0: #{pt_model_forward.1}
  #allocation0 [shape = 'u32[]', space=smem, size = 0x4, offset = 0x4, fixed_abs, tag = 'smem constant byte address 0x4 - core index']
  #allocation1 [shape = 'u32[144,128]{1,0:T(1,128)}', space=vmem, size = 0x12000, scoped, tag = 'internal scratch']
  %s0 = inlined_call_operand.vmem [shape: f32[8,64], index: 0, kind: input, shape index: {}]
  %s1 = inlined_call_operand.vmem [shape: f32[8,128], index: 1, kind: input, shape index: {}]
  %s2 = inlined_call_operand.hbm [shape: f32[448,128], index: 2, kind: input, shape index: {}]
  %s3 = inlined_call_operand.vmem [shape: f32[8,128], index: 3, kind: output, shape index: {}]
  %s4 = sld [smem:[#allocation0]]
  $region26: #{pt_model_forward.1} parent=0
    _
  %s6 = ssub.s32 1, %s4
  %s7 = scalar_select 0, %s6, %s4
  $region1: #{pt_model_forward.1} parent=0
    #allocation2 [shape = 'u8[229376]{0}', space=vmem, size = 0x38000, scoped, tag = 'input window, operand 2, single buffered']
    #allocation3 [shape = 's32[1]{0}', space=sflag, size = 0x4, scoped, tag = 'scoped memory for pt_model_forward.1']
    %8 = vsyncpa [#allocation3], 0
    // Predicated region
    $region2: #{pt_model_forward.1} parent=1 // pred_check
      _
    $region3: #{pt_model_forward.1} parent=1 // pred_check_branch
      %10 = sbr.rel (0) target = $region5
    $region4: #{pt_model_forward.1} parent=1 // pred_region
      _
    $region5: #{pt_model_forward.1} parent=1 // pred_fallthru
      _
    // Predicated region
    $region6: #{pt_model_forward.1} parent=1 // pred_check
      _
    $region7: #{pt_model_forward.1} parent=1 // pred_check_branch
      %12 = sbr.rel (0) target = $region9
    $region8: #{pt_model_forward.1} parent=1 // pred_region
      _
    $region9: #{pt_model_forward.1} parent=1 // pred_fallthru
      _
    // Predicated region
    $region10: #{pt_model_forward.1} parent=1 // pred_check
      _
    $region11: #{pt_model_forward.1} parent=1 // pred_check_branch
      %14 = sbr.rel (0) target = $region13
    $region12: #{pt_model_forward.1} parent=1 // pred_region
      %s16 = ssub.s32 7168, 7168
      %17 = vsyncadd [#allocation3], %s16
      %s18 = sshll.u32 [#allocation2], 4
      %s19 = int_to_ptr.vmem [resolvable:$true] %s18
      %24 = dma.hbm_to_vmem [thread:$0]  %s2, 7168, %s19, [#allocation3], 128, 128, 8
    $region13: #{pt_model_forward.1} parent=1 // pred_fallthru
      _
    // Predicated region
    $region14: #{pt_model_forward.1} parent=1 // pred_check
      _
    $region15: #{pt_model_forward.1} parent=1 // pred_check_branch
      %26 = sbr.rel (0) target = $region17
    $region16: #{pt_model_forward.1} parent=1 // pred_region
      %27 = dma.done [#allocation3], 7168
    $region17: #{pt_model_forward.1} parent=1 // pred_fallthru
      _
    %v28 = vld [vmem:[%s0] sm:$0xff]
    %v29 = vld [vmem:[%s1] sm:$0x1]
    %v30 = vld [vmem:[%s1 + $0x1] sm:$0x1]
    %v31 = vlaneseq
    %v32 = vshrl.u32 %v31, 7
    %v33 = vsub.s32 0, %v32
    %v34 = vrot.slane %v29, %v33
    %v35 = vsub.f32 %v28, %v34
    %v36 = vlaneseq
    %v37 = vshrl.u32 %v36, 7
    %v38 = vsub.s32 0, %v37
    %v39 = vrot.slane %v30, %v38
    %v40 = vmul.f32 %v35, %v39
    %v41 = vld [vmem:[#allocation2] sm:$0xff]
    %v42 = vld [vmem:[#allocation2 + $0x8] sm:$0xff]
    %v43 = vld [vmem:[#allocation2 + $0x10] sm:$0xff]
    %v44 = vld [vmem:[#allocation2 + $0x18] sm:$0xff]
    %v45 = vld [vmem:[#allocation2 + $0x20] sm:$0xff]
    %v46 = vld [vmem:[#allocation2 + $0x28] sm:$0xff]
    %v47 = vld [vmem:[#allocation2 + $0x30] sm:$0xff]
    %v48 = vld [vmem:[#allocation2 + $0x38] sm:$0xff]
    %v49 = vld [vmem:[#allocation2 + $0x40] sm:$0xff]
    %v50 = vld [vmem:[#allocation2 + $0x48] sm:$0xff]
    %v51 = vld [vmem:[#allocation2 + $0x50] sm:$0xff]
    %v52 = vld [vmem:[#allocation2 + $0x58] sm:$0xff]
    %v53 = vld [vmem:[#allocation2 + $0x60] sm:$0xff]
    %v54 = vld [vmem:[#allocation2 + $0x68] sm:$0xff]
    %v55 = vld [vmem:[#allocation2 + $0x70] sm:$0xff]
    %v56 = vld [vmem:[#allocation2 + $0x78] sm:$0xff]
    %v57 = vld [vmem:[#allocation2 + $0x80] sm:$0xff]
    %v58 = vld [vmem:[#allocation2 + $0x88] sm:$0xff]
    %v59 = vld [vmem:[#allocation2 + $0x90] sm:$0xff]
    %v60 = vld [vmem:[#allocation2 + $0x98] sm:$0xff]
    %v61 = vld [vmem:[#allocation2 + $0xa0] sm:$0xff]
    %v62 = vld [vmem:[#allocation2 + $0xa8] sm:$0xff]
    %v63 = vld [vmem:[#allocation2 + $0xb0] sm:$0xff]
    %v64 = vld [vmem:[#allocation2 + $0xb8] sm:$0xff]
    %v65 = vld [vmem:[#allocation2 + $0xc0] sm:$0xff]
    %v66 = vld [vmem:[#allocation2 + $0xc8] sm:$0xff]
    %v67 = vld [vmem:[#allocation2 + $0xd0] sm:$0xff]
    %v68 = vld [vmem:[#allocation2 + $0xd8] sm:$0xff]
    %v69 = vld [vmem:[#allocation2 + $0xe0] sm:$0xff]
    %v70 = vld [vmem:[#allocation2 + $0xe8] sm:$0xff]
    %v71 = vld [vmem:[#allocation2 + $0xf0] sm:$0xff]
    %v72 = vld [vmem:[#allocation2 + $0xf8] sm:$0xff]
    %v73 = vld [vmem:[#allocation2 + $0x100] sm:$0xff]
    %v74 = vld [vmem:[#allocation2 + $0x108] sm:$0xff]
    %v75 = vld [vmem:[#allocation2 + $0x110] sm:$0xff]
    %v76 = vld [vmem:[#allocation2 + $0x118] sm:$0xff]
    %v77 = vld [vmem:[#allocation2 + $0x120] sm:$0xff]
    %v78 = vld [vmem:[#allocation2 + $0x128] sm:$0xff]
    %v79 = vld [vmem:[#allocation2 + $0x130] sm:$0xff]
    %v80 = vld [vmem:[#allocation2 + $0x138] sm:$0xff]
    %v81 = vld [vmem:[#allocation2 + $0x140] sm:$0xff]
    %v82 = vld [vmem:[#allocation2 + $0x148] sm:$0xff]
    %v83 = vld [vmem:[#allocation2 + $0x150] sm:$0xff]
    %v84 = vld [vmem:[#allocation2 + $0x158] sm:$0xff]
    %v85 = vld [vmem:[#allocation2 + $0x160] sm:$0xff]
    %v86 = vld [vmem:[#allocation2 + $0x168] sm:$0xff]
    %v87 = vld [vmem:[#allocation2 + $0x170] sm:$0xff]
    %v88 = vld [vmem:[#allocation2 + $0x178] sm:$0xff]
    %v89 = vld [vmem:[#allocation2 + $0x180] sm:$0xff]
    %v90 = vld [vmem:[#allocation2 + $0x188] sm:$0xff]
    %v91 = vld [vmem:[#allocation2 + $0x190] sm:$0xff]
    %v92 = vld [vmem:[#allocation2 + $0x198] sm:$0xff]
    %v93 = vld [vmem:[#allocation2 + $0x1a0] sm:$0xff]
    %v94 = vld [vmem:[#allocation2 + $0x1a8] sm:$0xff]
    %v95 = vld [vmem:[#allocation2 + $0x1b0] sm:$0xff]
    %v96 = vld [vmem:[#allocation2 + $0x1b8] sm:$0xff]
    %v97 = vld [vmem:[%s1 + $0x2] sm:$0x1]
    %v98 = vld [vmem:[%s1 + $0x3] sm:$0x1]
    %v99 = vld [vmem:[%s1 + $0x4] sm:$0x1]
    %v100 = vld [vmem:[%s1 + $0x5] sm:$0x1]
    %v101 = vld [vmem:[%s1 + $0x6] sm:$0x1]
    %v102 = vld [vmem:[%s1 + $0x7] sm:$0x1]
    %v103 = vlaneseq
    %v104 = vshrl.u32 %v103, 7
    %v105 = vsub.s32 0, %v104
    %v106 = vrot.slane %v97, %v105
    %vm107 = vcmask 523264
    %v109 = vsel %vm107, %v40, 0
    %111 = vmatprep.subr.mxu0 0.0
    %112 = vmatpush1.msra.mxu0 0.0
    %113 = vmatprep.subr.mxu0 0.0
    %114 = vmatpush1.msra.mxu0 0.0
    %115 = vmatprep.subr.mxu0 0.0
    %116 = vmatpush1.msra.mxu0 0.0
    %117 = vmatprep.subr.mxu0 0.0
    %118 = vmatpush1.msra.mxu0 0.0
    %119 = vmatprep.subr.mxu0 0.0
    %120 = vmatpush1.msra.mxu0 0.0
    %121 = vmatprep.subr.mxu0 0.0
    %122 = vmatpush1.msra.mxu0 0.0
    %123 = vmatprep.subr.mxu0 0.0
    %124 = vmatpush1.msra.mxu0 0.0
    %125 = vmatprep.subr.mxu0 0.0
    %126 = vmatpush1.msra.mxu0 0.0
    %127 = vmatprep.subr.mxu0 0.0
    %128 = vmatpush1.msra.mxu0 %v48
    %129 = vmatprep.subr.mxu0 0.0
    %130 = vmatpush1.msra.mxu0 %v47
    %131 = vmatprep.subr.mxu0 0.0
    %132 = vmatpush1.msra.mxu0 %v46
    %133 = vmatprep.subr.mxu0 0.0
    %134 = vmatpush1.msra.mxu0 %v45
    %135 = vmatprep.subr.mxu0 0.0
    %136 = vmatpush1.msra.mxu0 %v44
    %137 = vmatprep.subr.mxu0 0.0
    %138 = vmatpush1.msra.mxu0 %v43
    %139 = vmatprep.subr.mxu0 0.0
    %140 = vmatpush1.msra.mxu0 %v42
    %141 = vmatprep.subr.mxu0 0.0
    %142 = vmatpush1.msra.mxu0 %v41
    %143 = vmatprep.subr.mxu0 0.0
    %144 = vmatpush2.msra.mxu0 0.0
    %145 = vmatprep.subr.mxu0 0.0
    %146 = vmatpush2.msra.mxu0 0.0
    %147 = vmatprep.subr.mxu0 0.0
    %148 = vmatpush2.msra.mxu0 0.0
    %149 = vmatprep.subr.mxu0 0.0
    %150 = vmatpush2.msra.mxu0 0.0
    %151 = vmatprep.subr.mxu0 0.0
    %152 = vmatpush2.msra.mxu0 0.0
    %153 = vmatprep.subr.mxu0 0.0
    %154 = vmatpush2.msra.mxu0 0.0
    %155 = vmatprep.subr.mxu0 0.0
    %156 = vmatpush2.msra.mxu0 0.0
    %157 = vmatprep.subr.mxu0 0.0
    %158 = vmatpush2.msra.mxu0 0.0
    %159 = vmatprep.subr.mxu0 0.0
    %160 = vmatpush2.msra.mxu0 0.0
    %161 = vmatprep.subr.mxu0 0.0
    %162 = vmatpush2.msra.mxu0 0.0
    %163 = vmatprep.subr.mxu0 0.0
    %164 = vmatpush2.msra.mxu0 0.0
    %165 = vmatprep.subr.mxu0 0.0
    %166 = vmatpush2.msra.mxu0 0.0
    %167 = vmatprep.subr.mxu0 0.0
    %168 = vmatpush2.msra.mxu0 0.0
    %169 = vmatprep.subr.mxu0 0.0
    %170 = vmatpush2.msra.mxu0 0.0
    %171 = vmatprep.subr.mxu0 0.0
    %172 = vmatpush2.msra.mxu0 0.0
    %173 = vmatprep.subr.mxu0 0.0
    %174 = vmatpush2.msra.mxu0 0.0
    %175 = vmatprep.mubr.f32.mxu0 0.0
    %176 = vmatmul.mubr.f32.gmra.mxu0 %v109
    %v177 = vpop.f32.mrf.mxu0
    %v178 = vadd.f32 %v106, %v177
    %v179 = vpop.f32.mrf.mxu0
    %180 = vdwg.mxu0
    %v181 = vxor.u32 %v178, 2147483648
    %v182 = vmul.f32 %v181, 1.442695
    %v183 = vpow.pop %v182
    %v184 = vadd.f32 %v183, 1.0
    %v185 = vrcp.pop %v184
    %v186 = vmul.f32 1.0, %v185
    %v187 = vmul.f32 %v178, %v186
    %v188 = vlaneseq
    %v189 = vshrl.u32 %v188, 7
    %v190 = vsub.s32 0, %v189
    %v191 = vrot.slane %v98, %v190
    %192 = vmatprep.subr.mxu0 0.0
    %193 = vmatpush1.msra.mxu0 %v64
    %194 = vmatprep.subr.mxu0 0.0
    %195 = vmatpush1.msra.mxu0 %v63
    %196 = vmatprep.subr.mxu0 0.0
    %197 = vmatpush1.msra.mxu0 %v62
    %198 = vmatprep.subr.mxu0 0.0
    %199 = vmatpush1.msra.mxu0 %v61
    %200 = vmatprep.subr.mxu0 0.0
    %201 = vmatpush1.msra.mxu0 %v60
    %202 = vmatprep.subr.mxu0 0.0
    %203 = vmatpush1.msra.mxu0 %v59
    %204 = vmatprep.subr.mxu0 0.0
    %205 = vmatpush1.msra.mxu0 %v58
    %206 = vmatprep.subr.mxu0 0.0
    %207 = vmatpush1.msra.mxu0 %v57
    %208 = vmatprep.subr.mxu0 0.0
    %209 = vmatpush1.msra.mxu0 %v56
    %210 = vmatprep.subr.mxu0 0.0
    %211 = vmatpush1.msra.mxu0 %v55
    %212 = vmatprep.subr.mxu0 0.0
    %213 = vmatpush1.msra.mxu0 %v54
    %214 = vmatprep.subr.mxu0 0.0
    %215 = vmatpush1.msra.mxu0 %v53
    %216 = vmatprep.subr.mxu0 0.0
    %217 = vmatpush1.msra.mxu0 %v52
    %218 = vmatprep.subr.mxu0 0.0
    %219 = vmatpush1.msra.mxu0 %v51
    %220 = vmatprep.subr.mxu0 0.0
    %221 = vmatpush1.msra.mxu0 %v50
    %222 = vmatprep.subr.mxu0 0.0
    %223 = vmatpush1.msra.mxu0 %v49
    %224 = vmatprep.subr.mxu0 0.0
    %225 = vmatpush2.msra.mxu0 0.0
    %226 = vmatprep.subr.mxu0 0.0
    %227 = vmatpush2.msra.mxu0 0.0
    %228 = vmatprep.subr.mxu0 0.0
    %229 = vmatpush2.msra.mxu0 0.0
    %230 = vmatprep.subr.mxu0 0.0
    %231 = vmatpush2.msra.mxu0 0.0
    %232 = vmatprep.subr.mxu0 0.0
    %233 = vmatpush2.msra.mxu0 0.0
    %234 = vmatprep.subr.mxu0 0.0
    %235 = vmatpush2.msra.mxu0 0.0
    %236 = vmatprep.subr.mxu0 0.0
    %237 = vmatpush2.msra.mxu0 0.0
    %238 = vmatprep.subr.mxu0 0.0
    %239 = vmatpush2.msra.mxu0 0.0
    %240 = vmatprep.subr.mxu0 0.0
    %241 = vmatpush2.msra.mxu0 0.0
    %242 = vmatprep.subr.mxu0 0.0
    %243 = vmatpush2.msra.mxu0 0.0
    %244 = vmatprep.subr.mxu0 0.0
    %245 = vmatpush2.msra.mxu0 0.0
    %246 = vmatprep.subr.mxu0 0.0
    %247 = vmatpush2.msra.mxu0 0.0
    %248 = vmatprep.subr.mxu0 0.0
    %249 = vmatpush2.msra.mxu0 0.0
    %250 = vmatprep.subr.mxu0 0.0
    %251 = vmatpush2.msra.mxu0 0.0
    %252 = vmatprep.subr.mxu0 0.0
    %253 = vmatpush2.msra.mxu0 0.0
    %254 = vmatprep.subr.mxu0 0.0
    %255 = vmatpush2.msra.mxu0 0.0
    %256 = vmatprep.mubr.f32.mxu0 0.0
    %257 = vmatmul.mubr.f32.gmra.mxu0 %v187
    %v258 = vpop.f32.mrf.mxu0
    %v259 = vadd.f32 %v191, %v258
    %v260 = vpop.f32.mrf.mxu0
    %261 = vdwg.mxu0
    %v262 = vxor.u32 %v259, 2147483648
    %v263 = vmul.f32 %v262, 1.442695
    %v264 = vpow.pop %v263
    %v265 = vadd.f32 %v264, 1.0
    %v266 = vrcp.pop %v265
    %v267 = vmul.f32 1.0, %v266
    %v268 = vmul.f32 %v259, %v267
    %v269 = vlaneseq
    %v270 = vshrl.u32 %v269, 7
    %v271 = vsub.s32 0, %v270
    %v272 = vrot.slane %v99, %v271
    %273 = vmatprep.subr.mxu0 0.0
    %274 = vmatpush1.msra.mxu0 %v80
    %275 = vmatprep.subr.mxu0 0.0
    %276 = vmatpush1.msra.mxu0 %v79
    %277 = vmatprep.subr.mxu0 0.0
    %278 = vmatpush1.msra.mxu0 %v78
    %279 = vmatprep.subr.mxu0 0.0
    %280 = vmatpush1.msra.mxu0 %v77
    %281 = vmatprep.subr.mxu0 0.0
    %282 = vmatpush1.msra.mxu0 %v76
    %283 = vmatprep.subr.mxu0 0.0
    %284 = vmatpush1.msra.mxu0 %v75
    %285 = vmatprep.subr.mxu0 0.0
    %286 = vmatpush1.msra.mxu0 %v74
    %287 = vmatprep.subr.mxu0 0.0
    %288 = vmatpush1.msra.mxu0 %v73
    %289 = vmatprep.subr.mxu0 0.0
    %290 = vmatpush1.msra.mxu0 %v72
    %291 = vmatprep.subr.mxu0 0.0
    %292 = vmatpush1.msra.mxu0 %v71
    %293 = vmatprep.subr.mxu0 0.0
    %294 = vmatpush1.msra.mxu0 %v70
    %295 = vmatprep.subr.mxu0 0.0
    %296 = vmatpush1.msra.mxu0 %v69
    %297 = vmatprep.subr.mxu0 0.0
    %298 = vmatpush1.msra.mxu0 %v68
    %299 = vmatprep.subr.mxu0 0.0
    %300 = vmatpush1.msra.mxu0 %v67
    %301 = vmatprep.subr.mxu0 0.0
    %302 = vmatpush1.msra.mxu0 %v66
    %303 = vmatprep.subr.mxu0 0.0
    %304 = vmatpush1.msra.mxu0 %v65
    %305 = vmatprep.subr.mxu0 0.0
    %306 = vmatpush2.msra.mxu0 0.0
    %307 = vmatprep.subr.mxu0 0.0
    %308 = vmatpush2.msra.mxu0 0.0
    %309 = vmatprep.subr.mxu0 0.0
    %310 = vmatpush2.msra.mxu0 0.0
    %311 = vmatprep.subr.mxu0 0.0
    %312 = vmatpush2.msra.mxu0 0.0
    %313 = vmatprep.subr.mxu0 0.0
    %314 = vmatpush2.msra.mxu0 0.0
    %315 = vmatprep.subr.mxu0 0.0
    %316 = vmatpush2.msra.mxu0 0.0
    %317 = vmatprep.subr.mxu0 0.0
    %318 = vmatpush2.msra.mxu0 0.0
    %319 = vmatprep.subr.mxu0 0.0
    %320 = vmatpush2.msra.mxu0 0.0
    %321 = vmatprep.subr.mxu0 0.0
    %322 = vmatpush2.msra.mxu0 0.0
    %323 = vmatprep.subr.mxu0 0.0
    %324 = vmatpush2.msra.mxu0 0.0
    %325 = vmatprep.subr.mxu0 0.0
    %326 = vmatpush2.msra.mxu0 0.0
    %327 = vmatprep.subr.mxu0 0.0
    %328 = vmatpush2.msra.mxu0 0.0
    %329 = vmatprep.subr.mxu0 0.0
    %330 = vmatpush2.msra.mxu0 0.0
    %331 = vmatprep.subr.mxu0 0.0
    %332 = vmatpush2.msra.mxu0 0.0
    %333 = vmatprep.subr.mxu0 0.0
    %334 = vmatpush2.msra.mxu0 0.0
    %335 = vmatprep.subr.mxu0 0.0
    %336 = vmatpush2.msra.mxu0 0.0
    %337 = vmatprep.mubr.f32.mxu0 0.0
    %338 = vmatmul.mubr.f32.gmra.mxu0 %v268
    %v339 = vpop.f32.mrf.mxu0
    %v340 = vadd.f32 %v272, %v339
    %v341 = vpop.f32.mrf.mxu0
    %342 = vdwg.mxu0
    %v343 = vxor.u32 %v340, 2147483648
    %v344 = vmul.f32 %v343, 1.442695
    %v345 = vpow.pop %v344
    %v346 = vadd.f32 %v345, 1.0
    %v347 = vrcp.pop %v346
    %v348 = vmul.f32 1.0, %v347
    %v349 = vmul.f32 %v340, %v348
    %v350 = vlaneseq
    %v351 = vshrl.u32 %v350, 7
    %v352 = vsub.s32 0, %v351
    %v353 = vrot.slane %v100, %v352
    %354 = vmatprep.subr.mxu0 0.0
    %355 = vmatpush1.msra.mxu0 %v96
    %356 = vmatprep.subr.mxu0 0.0
    %357 = vmatpush1.msra.mxu0 %v95
    %358 = vmatprep.subr.mxu0 0.0
    %359 = vmatpush1.msra.mxu0 %v94
    %360 = vmatprep.subr.mxu0 0.0
    %361 = vmatpush1.msra.mxu0 %v93
    %362 = vmatprep.subr.mxu0 0.0
    %363 = vmatpush1.msra.mxu0 %v92
    %364 = vmatprep.subr.mxu0 0.0
    %365 = vmatpush1.msra.mxu0 %v91
    %366 = vmatprep.subr.mxu0 0.0
    %367 = vmatpush1.msra.mxu0 %v90
    %368 = vmatprep.subr.mxu0 0.0
    %369 = vmatpush1.msra.mxu0 %v89
    %370 = vmatprep.subr.mxu0 0.0
    %371 = vmatpush1.msra.mxu0 %v88
    %372 = vmatprep.subr.mxu0 0.0
    %373 = vmatpush1.msra.mxu0 %v87
    %374 = vmatprep.subr.mxu0 0.0
    %375 = vmatpush1.msra.mxu0 %v86
    %376 = vmatprep.subr.mxu0 0.0
    %377 = vmatpush1.msra.mxu0 %v85
    %378 = vmatprep.subr.mxu0 0.0
    %379 = vmatpush1.msra.mxu0 %v84
    %380 = vmatprep.subr.mxu0 0.0
    %381 = vmatpush1.msra.mxu0 %v83
    %382 = vmatprep.subr.mxu0 0.0
    %383 = vmatpush1.msra.mxu0 %v82
    %384 = vmatprep.subr.mxu0 0.0
    %385 = vmatpush1.msra.mxu0 %v81
    %386 = vmatprep.subr.mxu0 0.0
    %387 = vmatpush2.msra.mxu0 0.0
    %388 = vmatprep.subr.mxu0 0.0
    %389 = vmatpush2.msra.mxu0 0.0
    %390 = vmatprep.subr.mxu0 0.0
    %391 = vmatpush2.msra.mxu0 0.0
    %392 = vmatprep.subr.mxu0 0.0
    %393 = vmatpush2.msra.mxu0 0.0
    %394 = vmatprep.subr.mxu0 0.0
    %395 = vmatpush2.msra.mxu0 0.0
    %396 = vmatprep.subr.mxu0 0.0
    %397 = vmatpush2.msra.mxu0 0.0
    %398 = vmatprep.subr.mxu0 0.0
    %399 = vmatpush2.msra.mxu0 0.0
    %400 = vmatprep.subr.mxu0 0.0
    %401 = vmatpush2.msra.mxu0 0.0
    %402 = vmatprep.subr.mxu0 0.0
    %403 = vmatpush2.msra.mxu0 0.0
    %404 = vmatprep.subr.mxu0 0.0
    %405 = vmatpush2.msra.mxu0 0.0
    %406 = vmatprep.subr.mxu0 0.0
    %407 = vmatpush2.msra.mxu0 0.0
    %408 = vmatprep.subr.mxu0 0.0
    %409 = vmatpush2.msra.mxu0 0.0
    %410 = vmatprep.subr.mxu0 0.0
    %411 = vmatpush2.msra.mxu0 0.0
    %412 = vmatprep.subr.mxu0 0.0
    %413 = vmatpush2.msra.mxu0 0.0
    %414 = vmatprep.subr.mxu0 0.0
    %415 = vmatpush2.msra.mxu0 0.0
    %416 = vmatprep.subr.mxu0 0.0
    %417 = vmatpush2.msra.mxu0 0.0
    %418 = vmatprep.mubr.f32.mxu0 0.0
    %419 = vmatmul.mubr.f32.gmra.mxu0 %v349
    %v420 = vpop.f32.mrf.mxu0
    %v421 = vadd.f32 %v353, %v420
    %v422 = vpop.f32.mrf.mxu0
    %423 = vdwg.mxu0
    %v424 = vlaneseq
    %v425 = vshrl.u32 %v424, 7
    %v426 = vsub.s32 0, %v425
    %v427 = vrot.slane %v101, %v426
    %v428 = vsub.f32 %v427, %v421
    %v429 = vmax.f32 %v428, 0.0
    %v430 = vand.u32 2147483647, %v428
    %v431 = vsub.f32 0.0, %v430
    %v432 = vmul.f32 %v431, 1.442695
    %v433 = vpow.pop %v432
    %v434 = vadd.f32 %v433, 1.0
    %v435 = vlog2.pop %v434
    %v436 = vmul.f32 %v435, 0.6931472
    %v437 = vmul.f32 -0.5, %v433
    %v438 = vadd.f32 %v437, 1.0
    %v439 = vmul.f32 %v438, %v433
    %v440 = vand.u32 2147483647, %v433
    %vm441 = vcmp.lt.f32.partialorder %v440, 0.0004427343
    %v442 = vsel %vm441, %v439, %v436
    %v443 = vadd.f32 %v429, %v442
    %v444 = vsub.f32 %v427, %v443
    %v445 = vlaneseq
    %v446 = vshrl.u32 %v445, 7
    %v447 = vsub.s32 0, %v446
    %v448 = vrot.slane %v102, %v447
    %v449 = vsub.f32 %v444, %v448
    %v450 = vmax.f32 %v449, 0.0
    %v451 = vand.u32 2147483647, %v449
    %v452 = vsub.f32 0.0, %v451
    %v453 = vmul.f32 %v452, 1.442695
    %v454 = vpow.pop %v453
    %v455 = vadd.f32 %v454, 1.0
    %v456 = vlog2.pop %v455
    %v457 = vmul.f32 %v456, 0.6931472
    %v458 = vmul.f32 -0.5, %v454
    %v459 = vadd.f32 %v458, 1.0
    %v460 = vmul.f32 %v459, %v454
    %v461 = vand.u32 2147483647, %v454
    %vm462 = vcmp.lt.f32.partialorder %v461, 0.0004427343
    %v463 = vsel %vm462, %v460, %v457
    %v464 = vadd.f32 %v450, %v463
    %v465 = vadd.f32 %v448, %v464
    %v466 = vmul.f32 %v465, 1.442695
    %v467 = vpow.pop %v466
    %v468 = vlaneseq
    %v469 = vand.u32 %v468, 127
    %vm470 = vcmp.ge.s32.totalorder %v469, 16
    %v471 = vsel %vm470, %v467, %v421
    %472 = vst [vmem:[%s3] sm:$0xff] %v471
    // Predicated region
    $region18: #{pt_model_forward.1} parent=1 // pred_check
      _
    $region19: #{pt_model_forward.1} parent=1 // pred_check_branch
      %474 = sbr.rel (0) target = $region21
    $region20: #{pt_model_forward.1} parent=1 // pred_region
      _
    $region21: #{pt_model_forward.1} parent=1 // pred_fallthru
      _
    // Predicated region
    $region22: #{pt_model_forward.1} parent=1 // pred_check
      _
    $region23: #{pt_model_forward.1} parent=1 // pred_check_branch
      %476 = sbr.rel (0) target = $region25
    $region24: #{pt_model_forward.1} parent=1 // pred_region
      _
    $region25: #{pt_model_forward.1} parent=1 // pred_fallthru
      _
    %477 = vsyncpa [#allocation3], 1

</llo_original>
